<compile_context>
chip_gen: v5e
topology: v5e:2x2
jax: 0.10.0
libtpu: 0.0.40
codegen_flags: <defaults>
</compile_context>

<pallas_src>
import functools

import jax
import jax.numpy as jnp
from jax.experimental import pallas as pl
from jax.experimental.pallas import tpu as pltpu


def _round_up(x, m):
    return ((x + m - 1) // m) * m


def _transition_down_kernel(x_ref, scale_ref, shift_ref, w_ref, b_ref, o_ref,
                            *, split_weights):
    # x_ref:       (th, 2*Wh, 2*Cp)  rows = (dh, j), lanes = [dw=0 ch | dw=1 ch]
    # scale/shift: (1, 2*Cp) f32     folded BatchNorm affine, tiled over dw
    # w_ref:       (1, Cp, Cp)       when not split_weights (Cp % 128 == 0)
    #              (2, 2*Cp, 128)    when split_weights (small C, zero-padded)
    # b_ref:       (1, Cp) f32
    # o_ref:       (th, Wh, Cp)
    th, wh, cp = o_ref.shape
    m = th * wh
    scale = scale_ref[...]
    shift = shift_ref[...]
    y = None
    for dh in range(2):
        # One pooling row-pair: (th, wh, 2cp) -> (m, 2cp); free when wh % 8 == 0.
        x2 = x_ref[:, dh * wh:(dh + 1) * wh, :].reshape(m, 2 * cp)
        # BN (eval, folded) + ReLU + cast in a single fused expression.
        h2 = jnp.maximum(x2.astype(jnp.float32) * scale + shift,
                         0.0).astype(w_ref.dtype)
        if split_weights:
            # Small-C: dw halves selected by zero-padded weight slabs (no
            # unaligned lane slices); conv output padded to one 128-lane tile.
            parts = (jnp.dot(h2, w_ref[0], preferred_element_type=jnp.float32),
                     jnp.dot(h2, w_ref[1], preferred_element_type=jnp.float32))
        else:
            w = w_ref[0]
            parts = (jnp.dot(h2[:, :cp], w, preferred_element_type=jnp.float32),
                     jnp.dot(h2[:, cp:], w, preferred_element_type=jnp.float32))
        for yk in parts:                       # fold the 2x2 max incrementally
            y = yk if y is None else jnp.maximum(y, yk)
    if split_weights:
        y = y[:, :cp]                          # drop padded conv-output lanes
    # Conv bias once, after the max (bias is constant over the pool window).
    o_ref[...] = (y + b_ref[...]).reshape(th, wh, cp).astype(o_ref.dtype)


@functools.partial(jax.jit, static_argnames=("eps", "matmul_dtype"))
def transition_down(x_nchw, gamma, beta, running_mean, running_var, conv_w,
                    conv_b, *, eps=1e-5, matmul_dtype=jnp.bfloat16):
    N, C, H, W = x_nchw.shape
    Hh, Wh = H // 2, W // 2
    # MaxPool2d(2,2) default: floor division drops a trailing odd row/column.
    x_nchw = x_nchw[:, :, :2 * Hh, :2 * Wh]
    out_dtype = x_nchw.dtype

    # ---- channel padding policy --------------------------------------------
    if C <= 128:
        Cp = C                        # small-C: no HBM channel-pad blowup
    elif C >= 640:
        Cp = _round_up(C, 256)        # fill 256-wide MXU (v6e/v7x) when compute-bound
    else:
        Cp = _round_up(C, 128)
    pad_c = (0, Cp - C)
    split_weights = (Cp % 128) != 0   # small-C kernel path

    hbm_dtype = jnp.dtype(matmul_dtype)   # activation carry dtype through HBM
    mm_dtype = jnp.float32 if split_weights else jnp.dtype(matmul_dtype)

    # ---- fold BatchNorm (eval) into scale/shift; prepare 1x1-conv weights ---
    f32 = jnp.float32
    inv_std = gamma.astype(f32) / jnp.sqrt(running_var.astype(f32) + eps)
    scale_c = jnp.pad(inv_std, pad_c)
    shift_c = jnp.pad(beta.astype(f32) - running_mean.astype(f32) * inv_std, pad_c)
    scale2 = jnp.tile(scale_c, 2).reshape(1, 2 * Cp)   # lanes: [dw=0 | dw=1]
    shift2 = jnp.tile(shift_c, 2).reshape(1, 2 * Cp)
    b_vec = jnp.pad(conv_b.astype(f32), pad_c).reshape(1, Cp)

    w_core = conv_w[:, :, 0, 0].T.astype(f32)          # (C_in, C_out)
    if split_weights:
        # dw=0 uses rows [:C], dw=1 uses rows [C:2C]; output lanes padded to 128.
        wa = jnp.zeros((2 * Cp, 128), f32).at[:Cp, :Cp].set(w_core)
        wb = jnp.zeros((2 * Cp, 128), f32).at[Cp:, :Cp].set(w_core)
        w_op = jnp.stack([wa, wb], axis=0).astype(mm_dtype)        # (2, 2Cp, 128)
    else:
        w_op = jnp.pad(w_core, (pad_c, pad_c)).astype(mm_dtype)[None]  # (1, Cp, Cp)

    # ---- NCHW -> pooling layout (one fused HBM pass under jit) --------------
    # (N, Hh, 2*Wh, 2*Cp): rows = (dh, j), lanes = (dw, c); all reshapes free.
    x = jnp.transpose(x_nchw, (0, 2, 3, 1)).astype(hbm_dtype)
    if Cp != C:
        x = jnp.pad(x, ((0, 0), (0, 0), (0, 0), pad_c))
    x = x.reshape(N, Hh, 2 * Wh, 2 * Cp)

    # ---- generation-aware VMEM budget -> tile rows ---------------------------
    try:
        vmem_cap = int(pltpu.get_tpu_info().vmem_capacity_bytes)
    except Exception:
        vmem_cap = 64 * 1024 * 1024
    vmem_limit = min(int(0.75 * vmem_cap), 100 * 1024 * 1024)  # ~96 MiB v5e/v6e, ~48 MiB v7x
    budget = int(0.6 * vmem_cap)

    hbm_i = jnp.dtype(hbm_dtype).itemsize
    out_i = jnp.dtype(out_dtype).itemsize
    mm_i = jnp.dtype(mm_dtype).itemsize
    # Double-buffered constants (scale/shift/weights/bias).
    const_bytes = 2 * (int(w_op.size) * mm_i + 5 * Cp * 4)
    # Per pooled output pixel: double-buffered input (4 px) + output DMA
    # blocks, fused BN/ReLU temporaries, and two live f32 conv accumulators
    # (128-lane-padded on the small-C path).
    per_pixel = (10 * hbm_i + 2 * mm_i + 2 * out_i + 16) * Cp + 8 * max(Cp, 128)
    max_pixels = max(8, (budget - const_bytes) // per_pixel)
    th = int(max(1, min(Hh, max_pixels // max(Wh, 1))))
    n_t = pl.cdiv(Hh, th)
    # >= 4 grid steps when possible (2 per TensorCore on v7x megacore).
    while N * n_t < 4 and th > 1:
        th = (th + 1) // 2
        n_t = pl.cdiv(Hh, th)

    kernel = functools.partial(_transition_down_kernel,
                               split_weights=split_weights)
    out = pl.pallas_call(
        kernel,
        out_shape=jax.ShapeDtypeStruct((N, Hh, Wh, Cp), out_dtype),
        grid=(N, n_t),
        in_specs=[
            pl.BlockSpec((None, th, 2 * Wh, 2 * Cp), lambda n, t: (n, t, 0, 0)),
            pl.BlockSpec((1, 2 * Cp), lambda n, t: (0, 0)),          # BN scale
            pl.BlockSpec((1, 2 * Cp), lambda n, t: (0, 0)),          # BN shift
            pl.BlockSpec(w_op.shape, lambda n, t: (0, 0, 0)),        # conv weight
            pl.BlockSpec((1, Cp), lambda n, t: (0, 0)),              # conv bias
        ],
        out_specs=pl.BlockSpec((None, th, Wh, Cp), lambda n, t: (n, t, 0, 0)),
        compiler_params=pltpu.CompilerParams(
            dimension_semantics=("parallel", "parallel"),
            vmem_limit_bytes=vmem_limit,
        ),
    )(x, scale2, shift2, w_op, b_vec)

    if Cp != C:
        out = out[..., :C]                     # drop channel padding
    return jnp.transpose(out, (0, 3, 1, 2))    # pool layout -> NCHW (fused pass)


def transition_down_reference(x, gamma, beta, mean, var, conv_w, conv_b,
                              eps=1e-5):
    # Pure-JAX NCHW reference (eval-mode BN, identity dropout).
    xn = (x - mean[None, :, None, None]) / jnp.sqrt(var[None, :, None, None] + eps)
    xn = xn * gamma[None, :, None, None] + beta[None, :, None, None]
    xn = jnp.maximum(xn, 0.0)
    y = jnp.einsum('nchw,oc->nohw', xn, conv_w[:, :, 0, 0]) \
        + conv_b[None, :, None, None]
    N, C, H, W = y.shape
    y = y.reshape(N, C, H // 2, 2, W // 2, 2)
    return jnp.max(y, axis=(3, 5))


def _make_inputs(key, N, C, H, W):
    kx, kg, kb, km, kv, kw, kc = jax.random.split(key, 7)
    x = jax.random.normal(kx, (N, C, H, W), dtype=jnp.float32)
    gamma = 1.0 + 0.1 * jax.random.normal(kg, (C,), dtype=jnp.float32)
    beta = 0.1 * jax.random.normal(kb, (C,), dtype=jnp.float32)
    mean = 0.1 * jax.random.normal(km, (C,), dtype=jnp.float32)
    var = 1.0 + 0.1 * jax.random.uniform(kv, (C,), dtype=jnp.float32)
    conv_w = 0.2 * jax.random.normal(kw, (C, C, 1, 1), dtype=jnp.float32)
    conv_b = 0.1 * jax.random.normal(kc, (C,), dtype=jnp.float32)
    return x, gamma, beta, mean, var, conv_w, conv_b


if __name__ == "__main__":
    key = jax.random.PRNGKey(0)
    k1, k2 = jax.random.split(key)

    # Case 1: small-C path (C=4, unpadded channels in HBM), bf16 HBM carry.
    args = _make_inputs(k1, 2, 4, 16, 16)
    ref = transition_down_reference(*args)
    out = jax.block_until_ready(transition_down(*args))
    assert out.shape == (2, 4, 8, 8), out.shape
    assert jnp.allclose(out, ref, atol=1e-1, rtol=5e-2), \
        float(jnp.max(jnp.abs(out - ref)))

    # Case 1b: f32 end-to-end -- exact check of layout / BN / conv / pooling.
    out_f32 = jax.block_until_ready(
        transition_down(*args, matmul_dtype=jnp.float32))
    assert jnp.allclose(out_f32, ref, atol=1e-5, rtol=1e-5), \
        float(jnp.max(jnp.abs(out_f32 - ref)))

    # Case 2: lane-dense MXU path (C=128), bf16 operands, f32 accumulation.
    args2 = _make_inputs(k2, 2, 128, 16, 16)
    ref2 = transition_down_reference(*args2)
    out2 = jax.block_until_ready(transition_down(*args2))
    assert out2.shape == (2, 128, 8, 8), out2.shape
    assert jnp.allclose(out2, ref2, atol=2e-1, rtol=5e-2), \
        float(jnp.max(jnp.abs(out2 - ref2)))

    print("KERNEL_OK")
</pallas_src>

<mosaic_0001>
module attributes {stable_mosaic.version = 11 : i64} {
  func.func @_transition_down_kernel(%arg0: i32, %arg1: i32, %arg2: memref<1x4x16x8xbf16, #tpu.memory_space<vmem>>, %arg3: memref<1x8xf32, #tpu.memory_space<vmem>>, %arg4: memref<1x8xf32, #tpu.memory_space<vmem>>, %arg5: memref<2x8x128xf32, #tpu.memory_space<vmem>>, %arg6: memref<1x4xf32, #tpu.memory_space<vmem>>, %arg7: memref<1x4x8x4xf32, #tpu.memory_space<vmem>>) attributes {dimension_semantics = [#tpu.dimension_semantics<parallel>, #tpu.dimension_semantics<parallel>], iteration_bounds = array<i64: 2, 2>, scalar_prefetch = 0 : i64, scratch_operands = 0 : i64, tpu.core_type = #tpu.core_type<tc>, window_params = [{transform_indices = @transform_0, window_bounds = array<i64: 1, 4, 16, 8>}, {pipeline_mode = #tpu.pipeline_mode<synchronous>, transform_indices = @transform_1, window_bounds = array<i64: 1, 8>}, {pipeline_mode = #tpu.pipeline_mode<synchronous>, transform_indices = @transform_2, window_bounds = array<i64: 1, 8>}, {pipeline_mode = #tpu.pipeline_mode<synchronous>, transform_indices = @transform_3, window_bounds = array<i64: 2, 8, 128>}, {pipeline_mode = #tpu.pipeline_mode<synchronous>, transform_indices = @transform_4, window_bounds = array<i64: 1, 4>}, {transform_indices = @transform_5, window_bounds = array<i64: 1, 4, 8, 4>}]} {
    %c0 = arith.constant 0 : index
    %c0_0 = arith.constant 0 : index
    %0 = vector.load %arg3[%c0, %c0_0] : memref<1x8xf32, #tpu.memory_space<vmem>>, vector<1x8xf32>
    %c0_1 = arith.constant 0 : index
    %c0_2 = arith.constant 0 : index
    %1 = vector.load %arg4[%c0_1, %c0_2] : memref<1x8xf32, #tpu.memory_space<vmem>>, vector<1x8xf32>
    %c0_3 = arith.constant 0 : index
    %c0_4 = arith.constant 0 : index
    %c0_5 = arith.constant 0 : index
    %c0_6 = arith.constant 0 : index
    %2 = vector.load %arg2[%c0_3, %c0_4, %c0_5, %c0_6] : memref<1x4x16x8xbf16, #tpu.memory_space<vmem>>, vector<1x4x8x8xbf16>
    %3 = vector.shape_cast %2 : vector<1x4x8x8xbf16> to vector<4x8x8xbf16>
    %4 = vector.shape_cast %3 : vector<4x8x8xbf16> to vector<32x8xbf16>
    %5 = arith.extf %4 : vector<32x8xbf16> to vector<32x8xf32>
    %6 = vector.broadcast %0 : vector<1x8xf32> to vector<32x8xf32>
    %7 = arith.mulf %5, %6 : vector<32x8xf32>
    %8 = vector.broadcast %1 : vector<1x8xf32> to vector<32x8xf32>
    %9 = arith.addf %7, %8 : vector<32x8xf32>
    %cst = arith.constant 0.000000e+00 : f32
    %10 = vector.broadcast %cst : f32 to vector<32x8xf32>
    %11 = arith.maximumf %9, %10 : vector<32x8xf32>
    %c0_7 = arith.constant 0 : index
    %c0_8 = arith.constant 0 : index
    %c0_9 = arith.constant 0 : index
    %12 = vector.load %arg5[%c0_7, %c0_8, %c0_9] : memref<2x8x128xf32, #tpu.memory_space<vmem>>, vector<1x8x128xf32>
    %13 = vector.shape_cast %12 : vector<1x8x128xf32> to vector<8x128xf32>
    %cst_10 = arith.constant dense<0.000000e+00> : vector<32x128xf32>
    %14 = tpu.matmul %11, %13, %cst_10 {dimension_numbers = #tpu.dot_dimension_numbers<[1], [0], [0], [1], [0, 0, 1, 1], [], []>} : vector<32x8xf32>, vector<8x128xf32>, vector<32x128xf32> -> vector<32x128xf32>
    %c1 = arith.constant 1 : index
    %c0_11 = arith.constant 0 : index
    %c0_12 = arith.constant 0 : index
    %15 = vector.load %arg5[%c1, %c0_11, %c0_12] : memref<2x8x128xf32, #tpu.memory_space<vmem>>, vector<1x8x128xf32>
    %16 = vector.shape_cast %15 : vector<1x8x128xf32> to vector<8x128xf32>
    %cst_13 = arith.constant dense<0.000000e+00> : vector<32x128xf32>
    %17 = tpu.matmul %11, %16, %cst_13 {dimension_numbers = #tpu.dot_dimension_numbers<[1], [0], [0], [1], [0, 0, 1, 1], [], []>} : vector<32x8xf32>, vector<8x128xf32>, vector<32x128xf32> -> vector<32x128xf32>
    %18 = arith.maximumf %14, %17 : vector<32x128xf32>
    %c0_14 = arith.constant 0 : index
    %c0_15 = arith.constant 0 : index
    %c8 = arith.constant 8 : index
    %c0_16 = arith.constant 0 : index
    %19 = vector.load %arg2[%c0_14, %c0_15, %c8, %c0_16] : memref<1x4x16x8xbf16, #tpu.memory_space<vmem>>, vector<1x4x8x8xbf16>
    %20 = vector.shape_cast %19 : vector<1x4x8x8xbf16> to vector<4x8x8xbf16>
    %21 = vector.shape_cast %20 : vector<4x8x8xbf16> to vector<32x8xbf16>
    %22 = arith.extf %21 : vector<32x8xbf16> to vector<32x8xf32>
    %23 = vector.broadcast %0 : vector<1x8xf32> to vector<32x8xf32>
    %24 = arith.mulf %22, %23 : vector<32x8xf32>
    %25 = vector.broadcast %1 : vector<1x8xf32> to vector<32x8xf32>
    %26 = arith.addf %24, %25 : vector<32x8xf32>
    %cst_17 = arith.constant 0.000000e+00 : f32
    %27 = vector.broadcast %cst_17 : f32 to vector<32x8xf32>
    %28 = arith.maximumf %26, %27 : vector<32x8xf32>
    %c0_18 = arith.constant 0 : index
    %c0_19 = arith.constant 0 : index
    %c0_20 = arith.constant 0 : index
    %29 = vector.load %arg5[%c0_18, %c0_19, %c0_20] : memref<2x8x128xf32, #tpu.memory_space<vmem>>, vector<1x8x128xf32>
    %30 = vector.shape_cast %29 : vector<1x8x128xf32> to vector<8x128xf32>
    %cst_21 = arith.constant dense<0.000000e+00> : vector<32x128xf32>
    %31 = tpu.matmul %28, %30, %cst_21 {dimension_numbers = #tpu.dot_dimension_numbers<[1], [0], [0], [1], [0, 0, 1, 1], [], []>} : vector<32x8xf32>, vector<8x128xf32>, vector<32x128xf32> -> vector<32x128xf32>
    %c1_22 = arith.constant 1 : index
    %c0_23 = arith.constant 0 : index
    %c0_24 = arith.constant 0 : index
    %32 = vector.load %arg5[%c1_22, %c0_23, %c0_24] : memref<2x8x128xf32, #tpu.memory_space<vmem>>, vector<1x8x128xf32>
    %33 = vector.shape_cast %32 : vector<1x8x128xf32> to vector<8x128xf32>
    %cst_25 = arith.constant dense<0.000000e+00> : vector<32x128xf32>
    %34 = tpu.matmul %28, %33, %cst_25 {dimension_numbers = #tpu.dot_dimension_numbers<[1], [0], [0], [1], [0, 0, 1, 1], [], []>} : vector<32x8xf32>, vector<8x128xf32>, vector<32x128xf32> -> vector<32x128xf32>
    %35 = arith.maximumf %18, %31 : vector<32x128xf32>
    %36 = arith.maximumf %35, %34 : vector<32x128xf32>
    %37 = vector.extract_strided_slice %36 {offsets = [0, 0], sizes = [32, 4], strides = [1, 1]} : vector<32x128xf32> to vector<32x4xf32>
    %c0_26 = arith.constant 0 : index
    %c0_27 = arith.constant 0 : index
    %38 = vector.load %arg6[%c0_26, %c0_27] : memref<1x4xf32, #tpu.memory_space<vmem>>, vector<1x4xf32>
    %39 = vector.broadcast %38 : vector<1x4xf32> to vector<32x4xf32>
    %40 = arith.addf %37, %39 : vector<32x4xf32>
    %41 = vector.shape_cast %40 : vector<32x4xf32> to vector<4x8x4xf32>
    %c0_28 = arith.constant 0 : index
    %c0_29 = arith.constant 0 : index
    %c0_30 = arith.constant 0 : index
    %c0_31 = arith.constant 0 : index
    %42 = vector.load %arg7[%c0_28, %c0_29, %c0_30, %c0_31] : memref<1x4x8x4xf32, #tpu.memory_space<vmem>>, vector<1x4x8x4xf32>
    %43 = vector.shape_cast %42 : vector<1x4x8x4xf32> to vector<4x8x4xf32>
    %44 = vector.shape_cast %41 : vector<4x8x4xf32> to vector<1x4x8x4xf32>
    tpu.vector_store %arg7[%c0_28, %c0_29, %c0_30, %c0_31], %44 {strides = array<i32>} : memref<1x4x8x4xf32, #tpu.memory_space<vmem>>, vector<1x4x8x4xf32>,
    return
  }
  func.func @transform_0(%arg0: i32, %arg1: i32) -> (i32, i32, i32, i32) {
    %c0_i32 = arith.constant 0 : i32
    %c0_i32_0 = arith.constant 0 : i32
    %c0_i32_1 = arith.constant 0 : i32
    return %arg0, %arg1, %c0_i32, %c0_i32_0 : i32, i32, i32, i32
  }
  func.func @transform_1(%arg0: i32, %arg1: i32) -> (i32, i32) {
    %c0_i32 = arith.constant 0 : i32
    %c0_i32_0 = arith.constant 0 : i32
    %c0_i32_1 = arith.constant 0 : i32
    return %c0_i32, %c0_i32_0 : i32, i32
  }
  func.func @transform_2(%arg0: i32, %arg1: i32) -> (i32, i32) {
    %c0_i32 = arith.constant 0 : i32
    %c0_i32_0 = arith.constant 0 : i32
    %c0_i32_1 = arith.constant 0 : i32
    return %c0_i32, %c0_i32_0 : i32, i32
  }
  func.func @transform_3(%arg0: i32, %arg1: i32) -> (i32, i32, i32) {
    %c0_i32 = arith.constant 0 : i32
    %c0_i32_0 = arith.constant 0 : i32
    %c0_i32_1 = arith.constant 0 : i32
    %c0_i32_2 = arith.constant 0 : i32
    return %c0_i32, %c0_i32_0, %c0_i32_1 : i32, i32, i32
  }
  func.func @transform_4(%arg0: i32, %arg1: i32) -> (i32, i32) {
    %c0_i32 = arith.constant 0 : i32
    %c0_i32_0 = arith.constant 0 : i32
    %c0_i32_1 = arith.constant 0 : i32
    return %c0_i32, %c0_i32_0 : i32, i32
  }
  func.func @transform_5(%arg0: i32, %arg1: i32) -> (i32, i32, i32, i32) {
    %c0_i32 = arith.constant 0 : i32
    %c0_i32_0 = arith.constant 0 : i32
    %c0_i32_1 = arith.constant 0 : i32
    return %arg0, %arg1, %c0_i32, %c0_i32_0 : i32, i32, i32, i32
  }
}

</mosaic_0001>

<llo_original>
// kernel: tile.13
$region0: #{tile.13}
  #allocation0 [shape = 's32[1]{0}', space=sflag, size = 0x4, scoped, tag = 'scoped memory for tile.13']
  %s0 = inlined_call_operand.vmem [shape: f32[4], index: 0, kind: input, shape index: {}]
  %s1 = inlined_call_operand.vmem [shape: f32[2,4], index: 1, kind: output, shape index: {}]
  // Predicated region
  $region2: #{tile.13} parent=0 // pred_check
    _
  $region3: #{tile.13} parent=0 // pred_check_branch
    %3 = sbr.rel (0) target = $region5
  $region4: #{tile.13} parent=0 // pred_region
    _
  $region5: #{tile.13} parent=0 // pred_fallthru
    _
  %v4 = vld [vmem:[%s0] ss:$0 sm:$0xff]
  %5 = vst [vmem:[%s1] sm:$0x3] %v4

// kernel: tile.14
$region0: #{tile.14}
  %s0 = inlined_call_operand.vmem [shape: f32[2,4], index: 0, kind: input, shape index: {}]
  %s1 = inlined_call_operand.vmem [shape: f32[1,8], index: 1, kind: output, shape index: {}]
  $region1: #{tile.14} parent=0
    #allocation0 [shape = 'u8[4096]{0}', space=vmem, size = 0x1000, scoped, tag = 'scoped mem for output reshape']
    #allocation1 [shape = 'u8[4096]{0}', space=vmem, size = 0x1000, scoped, tag = 'scoped mem for input reshape']
    %s3 = ssub.s32 4, 1
    %v4 = vld [vmem:[%s0] sm:%s3]
    %5 = vst [vmem:[#allocation1] sm:%s3] %v4
    %v6 = vld [vmem:[#allocation1] sm:$0x1]
    %vm7 = vcmask 31744
    %8 = vst.msk [vmem:[#allocation0] sm:$0x1] %vm7, %v6
    %s9 = scalar_lea.vmem [#allocation1], 1
    %v10 = vld [vmem:[%s9] sm:$0x1]
    %11 = vrot.lane.b32.xlu0 %v10, 4
    %v12 = vpop.permute.xlu0 %11
    %vm13 = vcmask 64544
    %14 = vst.msk [vmem:[#allocation0] sm:$0x1] %vm13, %v12
    %s16 = ssub.s32 2, 1
    %v17 = vld [vmem:[#allocation0] sm:%s16]
    %s19 = ssub.s32 2, 1
    %20 = vst [vmem:[%s1] sm:%s19] %v17

// kernel: transition_down.1
$region0: #{transition_down.1}
  #allocation0 [shape = 'u32[]', space=smem, size = 0x4, offset = 0x4, fixed_abs, tag = 'smem constant byte address 0x4 - core index']
  #allocation1 [shape = 'u32[72,128]{1,0:T(1,128)}', space=vmem, size = 0x9000, scoped, tag = 'internal scratch']
  %s0 = inlined_call_operand.vmem [shape: bf16[2,8,16,8], index: 0, kind: input, shape index: {}]
  %s1 = inlined_call_operand.vmem [shape: f32[1,8], index: 1, kind: input, shape index: {}]
  %s2 = inlined_call_operand.vmem [shape: f32[1,8], index: 2, kind: input, shape index: {}]
  %s3 = inlined_call_operand.vmem [shape: f32[2,8,128], index: 3, kind: input, shape index: {}]
  %s4 = inlined_call_operand.vmem [shape: f32[1,4], index: 4, kind: input, shape index: {}]
  %s5 = inlined_call_operand.vmem [shape: f32[2,8,8,4], index: 5, kind: output, shape index: {}]
  %s6 = sld [smem:[#allocation0]]
  $region53: #{transition_down.1} parent=0
    _
  %s8 = ssub.s32 1, %s6
  %s9 = scalar_select 0, %s8, %s6
  loop: start=0, step=1, limit=6
  $region2: #{transition_down.1} parent=0 // loop_pre_header
    _
  $region3: #{transition_down.1} parent=0 // loop_header
    %s11 = sphi 0, %s15
    %p12 = scmp.ge.s32.totalorder %s11, 6
    %s18 = sphi 0, %s30
    %s19 = sphi 0, %s26
    %s20 = sphi 0, %s18
    %s21 = sphi 0, %s19
    %s22 = sphi 0, %s20
    %s23 = sphi 0, %s21
    %s35 = sphi 0, %s37
    %s38 = sphi 0, %s35
    %s39 = sphi 0, %s38
    %s55 = sphi 0, %s39
    %s59 = sphi 0, %s59
    %s61 = sphi 0, %s59
    %s62 = sphi 0, %s61
    %s76 = sphi 0, %s62
    %s80 = sphi 0, %s80
    %s82 = sphi 0, %s80
    %s83 = sphi 0, %s82
    %s97 = sphi 0, %s83
    %s101 = sphi 0, %s101
    %s103 = sphi 0, %s101
    %s104 = sphi 0, %s103
    %s118 = sphi 0, %s104
    %s122 = sphi 0, %s122
    %s124 = sphi 0, %s122
    %s125 = sphi 0, %s124
    %s139 = sphi 0, %s125
    %s147 = sphi 0, %s149
    %s150 = sphi 0, %s147
    %s151 = sphi 0, %s150
    %s167 = sphi 0, %s151
  $region4: #{transition_down.1} parent=0 // loop_header_branch
    %14 = sbr.rel (%p12) target = $region8
  $region5: #{transition_down.1} parent=0 // loop_body
    %s16 = ssub.s32 %s11, 1
    %s17 = ssub.s32 %s11, 2
    %s24 = sadd.s32 1, %s19
    %p25 = scmp.ge.s32.totalorder %s24, 2
    %s26 = scalar_select %p25, 0, %s24
    %s27 = sadd.s32 1, %s18
    %s28 = scalar_select %p25, %s27, %s18
    %p29 = scmp.ge.s32.totalorder %s28, 2
    %s30 = scalar_select %p29, 0, %s28
    %s31 = ssub.s32 %s18, %s30
    %s32 = ssub.s32 %s19, %s26
    %s33 = sor.u32 %s31, %s32
    %p34 = scmp.eq.s32.totalorder %s33, 0
    %s36 = sadd.s32 %s35, 1
    %s37 = scalar_select %p34, %s35, %s36
    %p40 = pneg %p34
    %p41 = scmp.eq.s32.totalorder %s11, 3
    %p42 = por %p40, %p41
    %p43 = scmp.ne.s32.totalorder %s35, %s38
    %p44 = scmp.eq.s32.totalorder %s11, 0
    %p45 = por %p43, %p44
    %p46 = scmp.ne.s32.totalorder %s35, %s38
    %p47 = scmp.eq.s32.totalorder %s16, 3
    %p48 = por %p46, %p47
    %p49 = scmp.ne.s32.totalorder %s38, %s39
    %p50 = scmp.eq.s32.totalorder %s16, 0
    %p51 = por %p49, %p50
    %p52 = scmp.ne.s32.totalorder %s38, %s39
    %p53 = scmp.eq.s32.totalorder %s17, 3
    %p54 = por %p52, %p53
    %p56 = scmp.ne.s32.totalorder %s39, %s55
    %p57 = scmp.eq.s32.totalorder %s17, 0
    %p58 = por %p56, %p57
    %s60 = sadd.s32 %s59, 1
    %p63 = scmp.eq.s32.totalorder %s11, 3
    %p64 = scmp.ne.s32.totalorder %s59, %s61
    %p65 = scmp.eq.s32.totalorder %s11, 0
    %p66 = por %p64, %p65
    %p67 = scmp.ne.s32.totalorder %s59, %s61
    %p68 = scmp.eq.s32.totalorder %s16, 3
    %p69 = por %p67, %p68
    %p70 = scmp.ne.s32.totalorder %s61, %s62
    %p71 = scmp.eq.s32.totalorder %s16, 0
    %p72 = por %p70, %p71
    %p73 = scmp.ne.s32.totalorder %s61, %s62
    %p74 = scmp.eq.s32.totalorder %s17, 3
    %p75 = por %p73, %p74
    %p77 = scmp.ne.s32.totalorder %s62, %s76
    %p78 = scmp.eq.s32.totalorder %s17, 0
    %p79 = por %p77, %p78
    %s81 = sadd.s32 %s80, 1
    %p84 = scmp.eq.s32.totalorder %s11, 3
    %p85 = scmp.ne.s32.totalorder %s80, %s82
    %p86 = scmp.eq.s32.totalorder %s11, 0
    %p87 = por %p85, %p86
    %p88 = scmp.ne.s32.totalorder %s80, %s82
    %p89 = scmp.eq.s32.totalorder %s16, 3
    %p90 = por %p88, %p89
    %p91 = scmp.ne.s32.totalorder %s82, %s83
    %p92 = scmp.eq.s32.totalorder %s16, 0
    %p93 = por %p91, %p92
    %p94 = scmp.ne.s32.totalorder %s82, %s83
    %p95 = scmp.eq.s32.totalorder %s17, 3
    %p96 = por %p94, %p95
    %p98 = scmp.ne.s32.totalorder %s83, %s97
    %p99 = scmp.eq.s32.totalorder %s17, 0
    %p100 = por %p98, %p99
    %s102 = sadd.s32 %s101, 1
    %p105 = scmp.eq.s32.totalorder %s11, 3
    %p106 = scmp.ne.s32.totalorder %s101, %s103
    %p107 = scmp.eq.s32.totalorder %s11, 0
    %p108 = por %p106, %p107
    %p109 = scmp.ne.s32.totalorder %s101, %s103
    %p110 = scmp.eq.s32.totalorder %s16, 3
    %p111 = por %p109, %p110
    %p112 = scmp.ne.s32.totalorder %s103, %s104
    %p113 = scmp.eq.s32.totalorder %s16, 0
    %p114 = por %p112, %p113
    %p115 = scmp.ne.s32.totalorder %s103, %s104
    %p116 = scmp.eq.s32.totalorder %s17, 3
    %p117 = por %p115, %p116
    %p119 = scmp.ne.s32.totalorder %s104, %s118
    %p120 = scmp.eq.s32.totalorder %s17, 0
    %p121 = por %p119, %p120
    %s123 = sadd.s32 %s122, 1
    %p126 = scmp.eq.s32.totalorder %s11, 3
    %p127 = scmp.ne.s32.totalorder %s122, %s124
    %p128 = scmp.eq.s32.totalorder %s11, 0
    %p129 = por %p127, %p128
    %p130 = scmp.ne.s32.totalorder %s122, %s124
    %p131 = scmp.eq.s32.totalorder %s16, 3
    %p132 = por %p130, %p131
    %p133 = scmp.ne.s32.totalorder %s124, %s125
    %p134 = scmp.eq.s32.totalorder %s16, 0
    %p135 = por %p133, %p134
    %p136 = scmp.ne.s32.totalorder %s124, %s125
    %p137 = scmp.eq.s32.totalorder %s17, 3
    %p138 = por %p136, %p137
    %p140 = scmp.ne.s32.totalorder %s125, %s139
    %p141 = scmp.eq.s32.totalorder %s17, 0
    %p142 = por %p140, %p141
    %s143 = ssub.s32 %s18, %s30
    %s144 = ssub.s32 %s19, %s26
    %s145 = sor.u32 %s143, %s144
    %p146 = scmp.eq.s32.totalorder %s145, 0
    %s148 = sadd.s32 %s147, 1
    %s149 = scalar_select %p146, %s147, %s148
    %p152 = pneg %p146
    %p153 = scmp.eq.s32.totalorder %s11, 3
    %p154 = por %p152, %p153
    %p155 = scmp.ne.s32.totalorder %s147, %s150
    %p156 = scmp.eq.s32.totalorder %s11, 0
    %p157 = por %p155, %p156
    %p158 = scmp.ne.s32.totalorder %s147, %s150
    %p159 = scmp.eq.s32.totalorder %s16, 3
    %p160 = por %p158, %p159
    %p161 = scmp.ne.s32.totalorder %s150, %s151
    %p162 = scmp.eq.s32.totalorder %s16, 0
    %p163 = por %p161, %p162
    %p164 = scmp.ne.s32.totalorder %s150, %s151
    %p165 = scmp.eq.s32.totalorder %s17, 3
    %p166 = por %p164, %p165
    %p168 = scmp.ne.s32.totalorder %s151, %s167
    %p169 = scmp.eq.s32.totalorder %s17, 0
    %p170 = por %p168, %p169
    %p171 = scmp.le.s32.totalorder 1, %s11
    %p172 = scmp.lt.s32.totalorder %s11, 5
    %p173 = pnand %p171, %p172
    %p174 = pneg %p173
    // Predicated region
    $region9: #{transition_down.1} parent=5 // pred_check
      _
    $region10: #{transition_down.1} parent=5 // pred_check_branch
      %176 = sbr.rel (%p173) target = $region12
    $region11: #{transition_down.1} parent=5 // pred_region
      %s177 = ssub.s32 %s11, 1
      // Predicated region
      $region13: #{transition_down.1} parent=11 // pred_check
        %p178 = pneg %p72
      $region14: #{transition_down.1} parent=11 // pred_check_branch
        %180 = sbr.rel (%p178) target = $region16
      $region15: #{transition_down.1} parent=11 // pred_region
        _
      $region16: #{transition_down.1} parent=11 // pred_fallthru
        _
      // Predicated region
      $region17: #{transition_down.1} parent=11 // pred_check
        %p181 = pneg %p93
      $region18: #{transition_down.1} parent=11 // pred_check_branch
        %183 = sbr.rel (%p181) target = $region20
      $region19: #{transition_down.1} parent=11 // pred_region
        _
      $region20: #{transition_down.1} parent=11 // pred_fallthru
        _
      // Predicated region
      $region21: #{transition_down.1} parent=11 // pred_check
        %p184 = pneg %p114
      $region22: #{transition_down.1} parent=11 // pred_check_branch
        %186 = sbr.rel (%p184) target = $region24
      $region23: #{transition_down.1} parent=11 // pred_region
        _
      $region24: #{transition_down.1} parent=11 // pred_fallthru
        _
      // Predicated region
      $region25: #{transition_down.1} parent=11 // pred_check
        %p187 = pneg %p135
      $region26: #{transition_down.1} parent=11 // pred_check_branch
        %189 = sbr.rel (%p187) target = $region28
      $region27: #{transition_down.1} parent=11 // pred_region
        _
      $region28: #{transition_down.1} parent=11 // pred_fallthru
        _
    $region12: #{transition_down.1} parent=5 // pred_fallthru
      _
    %p190 = scmp.lt.s32.totalorder %s11, 4
    // Predicated region
    $region29: #{transition_down.1} parent=5 // pred_check
      %p191 = pneg %p190
    $region30: #{transition_down.1} parent=5 // pred_check_branch
      %193 = sbr.rel (%p191) target = $region32
    $region31: #{transition_down.1} parent=5 // pred_region
      // Predicated region
      $region33: #{transition_down.1} parent=31 // pred_check
        %p194 = pneg %p45
      $region34: #{transition_down.1} parent=31 // pred_check_branch
        %196 = sbr.rel (%p194) target = $region36
      $region35: #{transition_down.1} parent=31 // pred_region
        %s197 = smul.u32 4, %s19
        %p198 = scmp.lt.s32.totalorder %s18, 1
        %s199 = scalar_select %p198, %s18, 1
        %p200 = scmp.lt.s32.totalorder %s197, 7
        %s201 = scalar_select %p200, %s197, 7
        %s202 = smul.addr %s201, 2
        %s203 = smul.addr %s199, 16
        %s204 = sadd.s32 %s202, %s203
        %s205 = smul.addr %s204, 4
        %s206 = scalar_lea.vmem %s0, %s205
        %s207 = smul.u32 4, %s19
      $region36: #{transition_down.1} parent=31 // pred_fallthru
        _
    $region32: #{transition_down.1} parent=5 // pred_fallthru
      _
    %p208 = scmp.le.s32.totalorder 1, %s11
    %p209 = scmp.lt.s32.totalorder %s11, 5
    %p210 = pnand %p208, %p209
    %p211 = pneg %p210
    // Predicated region
    $region37: #{transition_down.1} parent=5 // pred_check
      _
    $region38: #{transition_down.1} parent=5 // pred_check_branch
      %213 = sbr.rel (%p210) target = $region40
    $region39: #{transition_down.1} parent=5 // pred_region
      %s214 = ssub.s32 %s11, 1
      %s215 = smul.u32 4, %s21
      %p216 = scmp.lt.s32.totalorder %s20, 1
      %s217 = scalar_select %p216, %s20, 1
      %p218 = scmp.lt.s32.totalorder %s215, 7
      %s219 = scalar_select %p218, %s215, 7
      %s220 = smul.addr %s219, 2
      %s221 = smul.addr %s217, 16
      %s222 = sadd.s32 %s220, %s221
      %s223 = smul.addr %s222, 4
      %s224 = scalar_lea.vmem %s0, %s223
      %p225 = pneg %p51
      %p226 = pneg %p48
      %p227 = pneg %p72
      %p228 = pneg %p69
      %p229 = pneg %p93
      %p230 = pneg %p90
      %p231 = pneg %p114
      %p232 = pneg %p111
      %p233 = pneg %p135
      %p234 = pneg %p132
      %p235 = pneg %p163
      %p236 = pneg %p160
      %s237 = smul.u32 4, %s21
      %p238 = scmp.lt.s32.totalorder %s20, 1
      %s239 = scalar_select %p238, %s20, 1
      %p240 = scmp.lt.s32.totalorder %s237, 7
      %s241 = scalar_select %p240, %s237, 7
      %s242 = smul.addr %s239, 8
      %s243 = sadd.s32 %s241, %s242
      %s244 = smul.addr %s243, 8
      %s245 = scalar_lea.vmem %s5, %s244
      %s246 = smul.u32 4, %s21
      %p247 = scmp.lt.s32.totalorder %s20, 1
      %s248 = scalar_select %p247, %s20, 1
      %p249 = scmp.lt.s32.totalorder %s246, 7
      %s250 = scalar_select %p249, %s246, 7
      %s251 = smul.addr %s250, 2
      %s252 = smul.addr %s248, 16
      %s253 = sadd.s32 %s251, %s252
      %s254 = smul.addr %s253, 4
      %s255 = scalar_lea.vmem %s0, %s254
      %s256 = smul.u32 4, %s21
      %s257 = smul.u32 4, %s21
      %p258 = scmp.lt.s32.totalorder %s20, 1
      %s259 = scalar_select %p258, %s20, 1
      %p260 = scmp.lt.s32.totalorder %s257, 7
      %s261 = scalar_select %p260, %s257, 7
      %s262 = smul.addr %s259, 8
      %s263 = sadd.s32 %s261, %s262
      %s264 = smul.addr %s263, 8
      %s265 = scalar_lea.vmem %s5, %s264
      %s266 = smul.u32 4, %s21
      %v267 = vld [vmem:[%s1] sm:$0x1]
      %v268 = vld [vmem:[%s2] sm:$0x1]
      %v269 = vld [vmem:[%s255] sm:$0xf]
      %v270 = vld [vmem:[%s255 + $0x8] sm:$0xf]
      %v271 = vld [vmem:[%s255 + $0x10] sm:$0xf]
      %v272 = vld [vmem:[%s255 + $0x18] sm:$0xf]
      %v273 = vunpack.c.l.bf16 %v269
      %v274 = vunpack.c.l.bf16 %v270
      %v275 = vunpack.c.l.bf16 %v271
      %v276 = vunpack.c.l.bf16 %v272
      %v278 = vperm.slane %v267, 0
      %v280 = vmul.f32 %v273, %v278
      %v281 = vmul.f32 %v274, %v278
      %v282 = vmul.f32 %v275, %v278
      %v283 = vmul.f32 %v276, %v278
      %v285 = vperm.slane %v268, 0
      %v287 = vadd.f32 %v280, %v285
      %v288 = vadd.f32 %v281, %v285
      %v289 = vadd.f32 %v282, %v285
      %v290 = vadd.f32 %v283, %v285
      %v291 = vmax.f32 %v287, 0.0
      %v292 = vmax.f32 %v288, 0.0
      %v293 = vmax.f32 %v289, 0.0
      %v294 = vmax.f32 %v290, 0.0
      %v295 = vld [vmem:[%s3] sm:$0xff]
      %vm296 = vcmask 64512
      %v298 = vsel %vm296, %v291, 0
      %v301 = vsel %vm296, %v292, 0
      %v304 = vsel %vm296, %v293, 0
      %v307 = vsel %vm296, %v294, 0
      %309 = vmatpush.msra.mxu0 0.0
      %310 = vmatpush.msra.mxu0 0.0
      %311 = vmatpush.msra.mxu0 0.0
      %312 = vmatpush.msra.mxu0 0.0
      %313 = vmatpush.msra.mxu0 0.0
      %314 = vmatpush.msra.mxu0 0.0
      %315 = vmatpush.msra.mxu0 0.0
      %316 = vmatpush.msra.mxu0 0.0
      %317 = vmatpush.msra.mxu0 0.0
      %318 = vmatpush.msra.mxu0 0.0
      %319 = vmatpush.msra.mxu0 0.0
      %320 = vmatpush.msra.mxu0 0.0
      %321 = vmatpush.msra.mxu0 0.0
      %322 = vmatpush.msra.mxu0 0.0
      %323 = vmatpush.msra.mxu0 0.0
      %324 = vmatpush.msra.mxu0 %v295
      %325 = vmatmul.f32.gmra.mxu0 %v298
      %v326 = vpop.f32.mrf.mxu0
      %v327 = vadd.f32 0.0, %v326
      %328 = vmatmul.f32.gmra.mxu0 %v301
      %v329 = vpop.f32.mrf.mxu0
      %v330 = vadd.f32 0.0, %v329
      %331 = vmatmul.f32.gmra.mxu0 %v304
      %v332 = vpop.f32.mrf.mxu0
      %v333 = vadd.f32 0.0, %v332
      %334 = vmatmul.f32.gmra.mxu0 %v307
      %v335 = vpop.f32.mrf.mxu0
      %v336 = vadd.f32 0.0, %v335
      %337 = vdwg.mxu0
      %s338 = scalar_lea.vmem %s3, 8
      %v339 = vld [vmem:[%s338] sm:$0xff]
      %340 = vmatpush.msra.mxu0 0.0
      %341 = vmatpush.msra.mxu0 0.0
      %342 = vmatpush.msra.mxu0 0.0
      %343 = vmatpush.msra.mxu0 0.0
      %344 = vmatpush.msra.mxu0 0.0
      %345 = vmatpush.msra.mxu0 0.0
      %346 = vmatpush.msra.mxu0 0.0
      %347 = vmatpush.msra.mxu0 0.0
      %348 = vmatpush.msra.mxu0 0.0
      %349 = vmatpush.msra.mxu0 0.0
      %350 = vmatpush.msra.mxu0 0.0
      %351 = vmatpush.msra.mxu0 0.0
      %352 = vmatpush.msra.mxu0 0.0
      %353 = vmatpush.msra.mxu0 0.0
      %354 = vmatpush.msra.mxu0 0.0
      %355 = vmatpush.msra.mxu0 %v339
      %356 = vmatmul.f32.gmra.mxu0 %v298
      %v357 = vpop.f32.mrf.mxu0
      %v358 = vadd.f32 0.0, %v357
      %359 = vmatmul.f32.gmra.mxu0 %v301
      %v360 = vpop.f32.mrf.mxu0
      %v361 = vadd.f32 0.0, %v360
      %362 = vmatmul.f32.gmra.mxu0 %v304
      %v363 = vpop.f32.mrf.mxu0
      %v364 = vadd.f32 0.0, %v363
      %365 = vmatmul.f32.gmra.mxu0 %v307
      %v366 = vpop.f32.mrf.mxu0
      %v367 = vadd.f32 0.0, %v366
      %368 = vdwg.mxu0
      %v369 = vmax.f32 %v327, %v358
      %v370 = vmax.f32 %v330, %v361
      %v371 = vmax.f32 %v333, %v364
      %v372 = vmax.f32 %v336, %v367
      %v373 = vld [vmem:[%s255 + $0x4] sm:$0xf]
      %v374 = vld [vmem:[%s255 + $0xc] sm:$0xf]
      %v375 = vld [vmem:[%s255 + $0x14] sm:$0xf]
      %v376 = vld [vmem:[%s255 + $0x1c] sm:$0xf]
      %v377 = vunpack.c.l.bf16 %v373
      %v378 = vunpack.c.l.bf16 %v374
      %v379 = vunpack.c.l.bf16 %v375
      %v380 = vunpack.c.l.bf16 %v376
      %v381 = vmul.f32 %v377, %v278
      %v382 = vmul.f32 %v378, %v278
      %v383 = vmul.f32 %v379, %v278
      %v384 = vmul.f32 %v380, %v278
      %v385 = vadd.f32 %v381, %v285
      %v386 = vadd.f32 %v382, %v285
      %v387 = vadd.f32 %v383, %v285
      %v388 = vadd.f32 %v384, %v285
      %v389 = vmax.f32 %v385, 0.0
      %v390 = vmax.f32 %v386, 0.0
      %v391 = vmax.f32 %v387, 0.0
      %v392 = vmax.f32 %v388, 0.0
      %v394 = vsel %vm296, %v389, 0
      %v397 = vsel %vm296, %v390, 0
      %v400 = vsel %vm296, %v391, 0
      %v403 = vsel %vm296, %v392, 0
      %405 = vmatpush.msra.mxu0 0.0
      %406 = vmatpush.msra.mxu0 0.0
      %407 = vmatpush.msra.mxu0 0.0
      %408 = vmatpush.msra.mxu0 0.0
      %409 = vmatpush.msra.mxu0 0.0
      %410 = vmatpush.msra.mxu0 0.0
      %411 = vmatpush.msra.mxu0 0.0
      %412 = vmatpush.msra.mxu0 0.0
      %413 = vmatpush.msra.mxu0 0.0
      %414 = vmatpush.msra.mxu0 0.0
      %415 = vmatpush.msra.mxu0 0.0
      %416 = vmatpush.msra.mxu0 0.0
      %417 = vmatpush.msra.mxu0 0.0
      %418 = vmatpush.msra.mxu0 0.0
      %419 = vmatpush.msra.mxu0 0.0
      %420 = vmatpush.msra.mxu0 %v295
      %421 = vmatmul.f32.gmra.mxu0 %v394
      %v422 = vpop.f32.mrf.mxu0
      %v423 = vadd.f32 0.0, %v422
      %424 = vmatmul.f32.gmra.mxu0 %v397
      %v425 = vpop.f32.mrf.mxu0
      %v426 = vadd.f32 0.0, %v425
      %427 = vmatmul.f32.gmra.mxu0 %v400
      %v428 = vpop.f32.mrf.mxu0
      %v429 = vadd.f32 0.0, %v428
      %430 = vmatmul.f32.gmra.mxu0 %v403
      %v431 = vpop.f32.mrf.mxu0
      %v432 = vadd.f32 0.0, %v431
      %433 = vdwg.mxu0
      %434 = vmatpush.msra.mxu0 0.0
      %435 = vmatpush.msra.mxu0 0.0
      %436 = vmatpush.msra.mxu0 0.0
      %437 = vmatpush.msra.mxu0 0.0
      %438 = vmatpush.msra.mxu0 0.0
      %439 = vmatpush.msra.mxu0 0.0
      %440 = vmatpush.msra.mxu0 0.0
      %441 = vmatpush.msra.mxu0 0.0
      %442 = vmatpush.msra.mxu0 0.0
      %443 = vmatpush.msra.mxu0 0.0
      %444 = vmatpush.msra.mxu0 0.0
      %445 = vmatpush.msra.mxu0 0.0
      %446 = vmatpush.msra.mxu0 0.0
      %447 = vmatpush.msra.mxu0 0.0
      %448 = vmatpush.msra.mxu0 0.0
      %449 = vmatpush.msra.mxu0 %v339
      %450 = vmatmul.f32.gmra.mxu0 %v394
      %v451 = vpop.f32.mrf.mxu0
      %v452 = vadd.f32 0.0, %v451
      %453 = vmatmul.f32.gmra.mxu0 %v397
      %v454 = vpop.f32.mrf.mxu0
      %v455 = vadd.f32 0.0, %v454
      %456 = vmatmul.f32.gmra.mxu0 %v400
      %v457 = vpop.f32.mrf.mxu0
      %v458 = vadd.f32 0.0, %v457
      %459 = vmatmul.f32.gmra.mxu0 %v403
      %v460 = vpop.f32.mrf.mxu0
      %v461 = vadd.f32 0.0, %v460
      %462 = vdwg.mxu0
      %v463 = vmax.f32 %v369, %v423
      %v464 = vmax.f32 %v370, %v426
      %v465 = vmax.f32 %v371, %v429
      %v466 = vmax.f32 %v372, %v432
      %v467 = vmax.f32 %v463, %v452
      %v468 = vmax.f32 %v464, %v455
      %v469 = vmax.f32 %v465, %v458
      %v470 = vmax.f32 %v466, %v461
      %v471 = vld [vmem:[%s4] sm:$0x1]
      %v473 = vperm.slane %v471, 0
      %v475 = vadd.f32 %v467, %v473
      %v476 = vadd.f32 %v468, %v473
      %v477 = vadd.f32 %v469, %v473
      %v478 = vadd.f32 %v470, %v473
      %vm479 = vcmask 31744
      %480 = vst.msk [vmem:[%s265] sm:$0xff] %vm479, %v475
      %481 = vst.msk [vmem:[%s265 + $0x8] sm:$0xff] %vm479, %v476
      %482 = vst.msk [vmem:[%s265 + $0x10] sm:$0xff] %vm479, %v477
      %483 = vst.msk [vmem:[%s265 + $0x18] sm:$0xff] %vm479, %v478
      %s484 = smul.u32 4, %s21
      %p485 = scmp.lt.s32.totalorder %s20, 1
      %s486 = scalar_select %p485, %s20, 1
      %p487 = scmp.lt.s32.totalorder %s484, 7
      %s488 = scalar_select %p487, %s484, 7
      %s489 = smul.addr %s486, 8
      %s490 = sadd.s32 %s488, %s489
      %s491 = smul.addr %s490, 8
      %s492 = scalar_lea.vmem %s5, %s491
      // Predicated region
      $region41: #{transition_down.1} parent=39 // pred_check
        %p493 = pneg %p160
      $region42: #{transition_down.1} parent=39 // pred_check_branch
        %495 = sbr.rel (%p493) target = $region44
      $region43: #{transition_down.1} parent=39 // pred_region
        %s496 = smul.u32 4, %s21
      $region44: #{transition_down.1} parent=39 // pred_fallthru
        _
    $region40: #{transition_down.1} parent=5 // pred_fallthru
      _
    %p497 = scmp.le.s32.totalorder 2, %s11
    // Predicated region
    $region45: #{transition_down.1} parent=5 // pred_check
      %p498 = pneg %p497
    $region46: #{transition_down.1} parent=5 // pred_check_branch
      %500 = sbr.rel (%p498) target = $region48
    $region47: #{transition_down.1} parent=5 // pred_region
      %s501 = ssub.s32 %s11, 2
      // Predicated region
      $region49: #{transition_down.1} parent=47 // pred_check
        %p502 = pneg %p166
      $region50: #{transition_down.1} parent=47 // pred_check_branch
        %504 = sbr.rel (%p502) target = $region52
      $region51: #{transition_down.1} parent=47 // pred_region
        %s505 = smul.u32 4, %s23
        %p506 = scmp.lt.s32.totalorder %s22, 1
        %s507 = scalar_select %p506, %s22, 1
        %p508 = scmp.lt.s32.totalorder %s505, 7
        %s509 = scalar_select %p508, %s505, 7
        %s510 = smul.addr %s507, 8
        %s511 = sadd.s32 %s509, %s510
        %s512 = smul.addr %s511, 8
        %s513 = scalar_lea.vmem %s5, %s512
      $region52: #{transition_down.1} parent=47 // pred_fallthru
        _
    $region48: #{transition_down.1} parent=5 // pred_fallthru
      _
  $region6: #{transition_down.1} parent=0 // loop_footer
    %s15 = sadd.s32 1, %s11
  $region7: #{transition_down.1} parent=0 // loop_footer_branch
    %10 = sbr.rel target = $region3
  $region8: #{transition_down.1} parent=0 // loop_exit
    _

</llo_original>
